<compile_context>
chip_gen: v7x
topology: tpu7x:2x2x1
jax: 0.10.0
libtpu: 0.0.40
codegen_flags: <defaults>
</compile_context>

<pallas_src>
import jax
import jax.numpy as jnp
import numpy as np
from jax.experimental import pallas as pl
from jax.experimental.pallas import tpu as pltpu

EPS = 1e-5


# --------------------------------------------------------------------------------------
# Kernels
# --------------------------------------------------------------------------------------
def conv_stats_kernel(xk_ref, wb_ref, pool_ref, y_ref, stats_ref):
    """Pass 1: banded conv matmul for one row tile + this tile's channel sum/sumsq."""
    # xk_ref:    (TM, KH*Wp*Cin)       K-merged, pre-shifted input rows
    # wb_ref:    (KH*Wp*Cin, Wo*Cout)  merged block-banded conv weight
    # pool_ref:  (Wo*Cout, Cout)       channel pooling matrix: pool[w*Cout + c, c] = 1
    # y_ref:     (TM, Wo*Cout)         conv output tile, lane-dense
    # stats_ref: (1, 2, Cout)          this tile's partial [sum, sumsq] per channel
    #
    # TODO(synk): at production channel counts cast xk/wb to bf16 (wb once, in prep) and keep
    # preferred_element_type=f32 for the native MXU path + half the wb bytes; it fails this
    # test's 1e-4 tolerance, so operands stay f32 here.
    # TODO(synk): at production shapes tile the K axis on an "arbitrary" grid dim and hold the
    # accumulator in a VMEM scratch with pl.when init/finalize instead of one big matmul.
    y = jax.lax.dot_general(
        xk_ref[...], wb_ref[...],
        dimension_numbers=(((1,), (0,)), ((), ())),
        preferred_element_type=jnp.float32)
    y_ref[...] = y.astype(y_ref.dtype)

    s = jnp.sum(y, axis=0, keepdims=True)            # (1, Wo*Cout) sublane reduce
    ss = jnp.sum(y * y, axis=0, keepdims=True)       # (1, Wo*Cout)
    both = jnp.concatenate([s, ss], axis=0)          # (2, Wo*Cout)  one stacked stats dot
    stats_ref[...] = jax.lax.dot_general(            # fold W axis -> per-channel
        both, pool_ref[...],
        dimension_numbers=(((1,), (0,)), ((), ())),
        preferred_element_type=jnp.float32)[None]    # (1, 2, Cout)


def bn_relu_kernel(y_ref, scale_ref, shift_ref, o_ref):
    """Pass 2: fused normalize + affine + ReLU, one lane-dense FMA pass per row tile."""
    # TODO(synk): emit a bf16 output if the next layer accepts it (halves writeback bytes).
    o_ref[...] = jnp.maximum(
        y_ref[...] * scale_ref[...] + shift_ref[...], 0.0).astype(o_ref.dtype)


# --------------------------------------------------------------------------------------
# One-time parameter prep (hoisted out of the per-call forward, host numpy)
# --------------------------------------------------------------------------------------
def prepare_convblock_params(w_hwio, gamma, beta, *, H, W, padding=1):
    KH, KW, Cin, Cout = w_hwio.shape
    Hp, Wp = H + 2 * padding, W + 2 * padding
    Ho, Wo = Hp - KH + 1, Wp - KW + 1

    # Merged block-banded weight:
    #   wb[kh*Wp*Cin + (wo+kw)*Cin + ci, wo*Cout + co] = w[kh, kw, ci, co]
    # TODO(synk): this band is O(KH*Wp*Cin * Wo*Cout) and is double-buffered by its BlockSpec;
    # at production shapes (e.g. W=56, C=64) it overflows v7x's 64 MiB VMEM and inflates MXU
    # FLOPs by ~W/KW.  There, tile the band along Wo with a BlockSpec or switch to KH*KW
    # (tile,Cin)@(Cin,Cout) matmuls with the dense KH*KW*Cin*Cout weight, sizing tiles per
    # generation (v7x 64 MiB vs v5e/v6e 128 MiB).
    w = np.asarray(w_hwio, dtype=np.float32)
    wb = np.zeros((KH, Wp * Cin, Wo * Cout), np.float32)
    for kh in range(KH):
        for kw in range(KW):
            for wo in range(Wo):
                wb[kh, (wo + kw) * Cin:(wo + kw + 1) * Cin,
                   wo * Cout:(wo + 1) * Cout] = w[kh, kw]
    wb = wb.reshape(KH * Wp * Cin, Wo * Cout)

    lane_c = np.arange(Wo * Cout) % Cout
    pool = np.eye(Cout, dtype=np.float32)[lane_c]    # (Wo*Cout, Cout)

    return dict(
        wb=jnp.asarray(wb), pool=jnp.asarray(pool),
        gamma=jnp.asarray(gamma, jnp.float32), beta=jnp.asarray(beta, jnp.float32),
        KH=KH, KW=KW, Cin=Cin, Cout=Cout, padding=padding)


# --------------------------------------------------------------------------------------
# Forward
# --------------------------------------------------------------------------------------
def conv_block_forward(x_nchw, params, *, tile_rows=8):
    """ConvBlock forward: (N, Cin, H, W) -> (N, Cout, H, W).  BN uses batch stats (train mode)."""
    wb, pool = params["wb"], params["pool"]
    gamma, beta = params["gamma"], params["beta"]
    KH, KW, Cin, Cout = params["KH"], params["KW"], params["Cin"], params["Cout"]
    p = params["padding"]

    N, _, H, W = x_nchw.shape
    Hp, Wp = H + 2 * p, W + 2 * p
    Ho, Wo = Hp - KH + 1, Wp - KW + 1
    NHo, Kdim, WCout = N * Ho, KH * Wp * Cin, Wo * Cout

    tm = min(tile_rows, NHo)
    assert NHo % tm == 0 and tm % 8 == 0, "row tile must divide N*Ho and be a multiple of 8"
    R = NHo // tm

    # Layout plumbing: NCHW -> zero-padded NHWC -> K-merged lane-dense rows.  Pre-staging the
    # KH shifted views here avoids sublane-misaligned slices (XLU relayout copies) in-kernel.
    # TODO(synk): when chaining ConvBlocks, keep activations in the padded lane-dense layout
    # between kernels (or fold the halo memset into the kernel) instead of re-transposing and
    # re-padding through HBM every call.
    x_nhwc = jnp.transpose(x_nchw, (0, 2, 3, 1)).astype(jnp.float32)
    x_pad = jnp.pad(x_nhwc, ((0, 0), (p, p), (p, p), (0, 0)))
    views = [x_pad[:, kh:kh + Ho, :, :] for kh in range(KH)]
    x_km = jnp.stack(views, axis=2).reshape(NHo, Kdim)       # (N*Ho, KH*Wp*Cin)

    # ---- Pass 1: conv + per-tile partial BN stats; row axis fully parallel (v7x 2 TCs). ----
    # TODO(synk): wb / pool have constant index_maps; single-buffer them with
    # pipeline_mode=pl.Buffered(1) once VMEM gets tight at production shapes (v7x 64 MiB).
    y_dense, part_stats = pl.pallas_call(
        conv_stats_kernel,
        out_shape=(jax.ShapeDtypeStruct((NHo, WCout), jnp.float32),
                   jax.ShapeDtypeStruct((R, 2, Cout), jnp.float32)),
        grid=(R,),
        in_specs=[
            pl.BlockSpec((tm, Kdim), lambda i: (i, 0)),
            pl.BlockSpec((Kdim, WCout), lambda i: (0, 0)),
            pl.BlockSpec((WCout, Cout), lambda i: (0, 0)),
        ],
        out_specs=(pl.BlockSpec((tm, WCout), lambda i: (i, 0)),
                   pl.BlockSpec((1, 2, Cout), lambda i: (i, 0, 0))),
        compiler_params=pltpu.CompilerParams(dimension_semantics=("parallel",)),
    )(x_km, wb, pool)

    # ---- Tiny cross-tile stats reduction + scale/shift (O(Cout) work, stays in wrapper). ----
    stats = jnp.sum(part_stats, axis=0)                        # (2, Cout)
    inv_cnt = 1.0 / float(NHo * Wo)
    mean = stats[0] * inv_cnt
    var = jnp.maximum(stats[1] * inv_cnt - mean * mean, 0.0)   # clamp one-pass variance
    scale = gamma * jax.lax.rsqrt(var + EPS)
    shift = beta - mean * scale
    # NOTE: the Conv2d bias is intentionally folded away -- train-mode BatchNorm subtracts the
    # per-channel batch mean, which cancels any per-channel bias exactly.  If this kernel is
    # ever used with running (eval) stats, the bias must be restored.
    scale_d = jnp.tile(scale, Wo).reshape(1, WCout)            # lane-dense per-column scale
    shift_d = jnp.tile(shift, Wo).reshape(1, WCout)

    # ---- Pass 2: fused normalize + affine + ReLU over row tiles. ----
    out_dense = pl.pallas_call(
        bn_relu_kernel,
        out_shape=jax.ShapeDtypeStruct((NHo, WCout), jnp.float32),
        grid=(R,),
        in_specs=[
            pl.BlockSpec((tm, WCout), lambda i: (i, 0)),
            pl.BlockSpec((1, WCout), lambda i: (0, 0)),
            pl.BlockSpec((1, WCout), lambda i: (0, 0)),
        ],
        out_specs=pl.BlockSpec((tm, WCout), lambda i: (i, 0)),
        compiler_params=pltpu.CompilerParams(dimension_semantics=("parallel",)),
    )(y_dense, scale_d, shift_d)

    out_nhwc = out_dense.reshape(N, Ho, Wo, Cout)
    return jnp.transpose(out_nhwc, (0, 3, 1, 2))


# --------------------------------------------------------------------------------------
# Pure-JAX reference (mirrors PyTorch ConvBlock.forward, BN in training mode)
# --------------------------------------------------------------------------------------
def reference_forward(x_nchw, w_hwio, conv_bias, gamma, beta, *, padding=1):
    w_oihw = jnp.transpose(w_hwio, (3, 2, 0, 1))
    y = jax.lax.conv_general_dilated(
        x_nchw.astype(jnp.float32), w_oihw.astype(jnp.float32),
        window_strides=(1, 1),
        padding=((padding, padding), (padding, padding)),
        dimension_numbers=("NCHW", "OIHW", "NCHW"))
    y = y + conv_bias[None, :, None, None]
    mean = jnp.mean(y, axis=(0, 2, 3), keepdims=True)
    var = jnp.mean((y - mean) ** 2, axis=(0, 2, 3), keepdims=True)
    y = (y - mean) * jax.lax.rsqrt(var + EPS)
    y = y * gamma[None, :, None, None] + beta[None, :, None, None]
    return jnp.maximum(y, 0.0)


if __name__ == "__main__":
    key = jax.random.PRNGKey(0)
    k_x, k_w, k_cb, k_g, k_b = jax.random.split(key, 5)

    # Small shapes consistent with ConvBlock(in_channels=4, out_channels=8, 3, 1, 1)
    N, Cin, H, W = 2, 4, 16, 16
    Cout, KH, KW = 8, 3, 3

    x = jax.random.normal(k_x, (N, Cin, H, W), dtype=jnp.float32)
    w_hwio = jax.random.normal(k_w, (KH, KW, Cin, Cout), dtype=jnp.float32) * 0.1
    conv_bias = jax.random.normal(k_cb, (Cout,), dtype=jnp.float32) * 0.1
    gamma = 1.0 + 0.1 * jax.random.normal(k_g, (Cout,), dtype=jnp.float32)
    beta = 0.1 * jax.random.normal(k_b, (Cout,), dtype=jnp.float32)

    params = prepare_convblock_params(w_hwio, gamma, beta, H=H, W=W, padding=1)
    out = conv_block_forward(x, params, tile_rows=8)   # grid=(4,) row tiles at this size
    out = jax.block_until_ready(out)

    ref = reference_forward(x, w_hwio, conv_bias, gamma, beta, padding=1)
    np.testing.assert_allclose(np.asarray(out), np.asarray(ref), atol=1e-4, rtol=1e-4)
    assert out.shape == (N, Cout, H, W)

    print("KERNEL_OK")
</pallas_src>

<mosaic_0001>
module attributes {stable_mosaic.version = 11 : i64} {
  func.func @conv_stats_kernel(%arg0: i32, %arg1: memref<8x216xf32, #tpu.memory_space<vmem>>, %arg2: memref<216x128xf32, #tpu.memory_space<vmem>>, %arg3: memref<128x8xf32, #tpu.memory_space<vmem>>, %arg4: memref<8x128xf32, #tpu.memory_space<vmem>>, %arg5: memref<1x2x8xf32, #tpu.memory_space<vmem>>) attributes {dimension_semantics = [#tpu.dimension_semantics<parallel>], iteration_bounds = array<i64: 4>, scalar_prefetch = 0 : i64, scratch_operands = 0 : i64, tpu.core_type = #tpu.core_type<tc>, window_params = [{transform_indices = @transform_0, window_bounds = array<i64: 8, 216>}, {pipeline_mode = #tpu.pipeline_mode<synchronous>, transform_indices = @transform_1, window_bounds = array<i64: 216, 128>}, {pipeline_mode = #tpu.pipeline_mode<synchronous>, transform_indices = @transform_2, window_bounds = array<i64: 128, 8>}, {transform_indices = @transform_3, window_bounds = array<i64: 8, 128>}, {transform_indices = @transform_4, window_bounds = array<i64: 1, 2, 8>}]} {
    %c0 = arith.constant 0 : index
    %c0_0 = arith.constant 0 : index
    %0 = vector.load %arg1[%c0, %c0_0] : memref<8x216xf32, #tpu.memory_space<vmem>>, vector<8x216xf32>
    %c0_1 = arith.constant 0 : index
    %c0_2 = arith.constant 0 : index
    %1 = vector.load %arg2[%c0_1, %c0_2] : memref<216x128xf32, #tpu.memory_space<vmem>>, vector<216x128xf32>
    %cst = arith.constant dense<0.000000e+00> : vector<8x128xf32>
    %2 = tpu.matmul %0, %1, %cst {dimension_numbers = #tpu.dot_dimension_numbers<[1], [0], [0], [1], [0, 0, 1, 1], [], []>} : vector<8x216xf32>, vector<216x128xf32>, vector<8x128xf32> -> vector<8x128xf32>
    %c0_3 = arith.constant 0 : index
    %c0_4 = arith.constant 0 : index
    %3 = vector.load %arg4[%c0_3, %c0_4] : memref<8x128xf32, #tpu.memory_space<vmem>>, vector<8x128xf32>
    tpu.vector_store %arg4[%c0_3, %c0_4], %2 {strides = array<i32>} : memref<8x128xf32, #tpu.memory_space<vmem>>, vector<8x128xf32>,
    %cst_5 = arith.constant dense<0.000000e+00> : vector<128xf32>
    %4 = vector.multi_reduction <add>, %2, %cst_5 [0] : vector<8x128xf32> to vector<128xf32>
    %5 = vector.shape_cast %4 : vector<128xf32> to vector<1x128xf32>
    %6 = arith.mulf %2, %2 : vector<8x128xf32>
    %cst_6 = arith.constant dense<0.000000e+00> : vector<128xf32>
    %7 = vector.multi_reduction <add>, %6, %cst_6 [0] : vector<8x128xf32> to vector<128xf32>
    %8 = vector.shape_cast %7 : vector<128xf32> to vector<1x128xf32>
    %9 = tpu.concatenate %5, %8 in 0 : vector<1x128xf32>, vector<1x128xf32> -> vector<2x128xf32>
    %c0_7 = arith.constant 0 : index
    %c0_8 = arith.constant 0 : index
    %10 = vector.load %arg3[%c0_7, %c0_8] : memref<128x8xf32, #tpu.memory_space<vmem>>, vector<128x8xf32>
    %cst_9 = arith.constant dense<0.000000e+00> : vector<2x8xf32>
    %11 = tpu.matmul %9, %10, %cst_9 {dimension_numbers = #tpu.dot_dimension_numbers<[1], [0], [0], [1], [0, 0, 1, 1], [], []>} : vector<2x128xf32>, vector<128x8xf32>, vector<2x8xf32> -> vector<2x8xf32>
    %12 = vector.shape_cast %11 : vector<2x8xf32> to vector<1x2x8xf32>
    %c0_10 = arith.constant 0 : index
    %c0_11 = arith.constant 0 : index
    %c0_12 = arith.constant 0 : index
    %13 = vector.load %arg5[%c0_10, %c0_11, %c0_12] : memref<1x2x8xf32, #tpu.memory_space<vmem>>, vector<1x2x8xf32>
    tpu.vector_store %arg5[%c0_10, %c0_11, %c0_12], %12 {strides = array<i32>} : memref<1x2x8xf32, #tpu.memory_space<vmem>>, vector<1x2x8xf32>,
    return
  }
  func.func @transform_0(%arg0: i32) -> (i32, i32) {
    %c0_i32 = arith.constant 0 : i32
    %c0_i32_0 = arith.constant 0 : i32
    return %arg0, %c0_i32 : i32, i32
  }
  func.func @transform_1(%arg0: i32) -> (i32, i32) {
    %c0_i32 = arith.constant 0 : i32
    %c0_i32_0 = arith.constant 0 : i32
    %c0_i32_1 = arith.constant 0 : i32
    return %c0_i32, %c0_i32_0 : i32, i32
  }
  func.func @transform_2(%arg0: i32) -> (i32, i32) {
    %c0_i32 = arith.constant 0 : i32
    %c0_i32_0 = arith.constant 0 : i32
    %c0_i32_1 = arith.constant 0 : i32
    return %c0_i32, %c0_i32_0 : i32, i32
  }
  func.func @transform_3(%arg0: i32) -> (i32, i32) {
    %c0_i32 = arith.constant 0 : i32
    %c0_i32_0 = arith.constant 0 : i32
    return %arg0, %c0_i32 : i32, i32
  }
  func.func @transform_4(%arg0: i32) -> (i32, i32, i32) {
    %c0_i32 = arith.constant 0 : i32
    %c0_i32_0 = arith.constant 0 : i32
    %c0_i32_1 = arith.constant 0 : i32
    return %arg0, %c0_i32, %c0_i32_0 : i32, i32, i32
  }
}

</mosaic_0001>

<llo_original>
// kernel: tpu_custom_call.1
$region0: #{tpu_custom_call.1}
  #allocation0 [shape = 'u32[]', space=smem, size = 0x4, offset = 0x4, fixed_abs, tag = 'smem constant byte address 0x4 - core index']
  #allocation1 [shape = 'u32[144,128]{1,0:T(1,128)}', space=vmem, size = 0x12000, scoped, tag = 'internal scratch']
  %s0 = inlined_call_operand.vmem [shape: f32[32,216], index: 0, kind: input, shape index: {}]
  %s1 = inlined_call_operand.hbm [shape: f32[216,128], index: 1, kind: input, shape index: {}]
  %s2 = inlined_call_operand.vmem [shape: f32[128,8], index: 2, kind: input, shape index: {}]
  %s3 = inlined_call_operand.hbm [shape: f32[32,128], index: 3, kind: output, shape index: {0}]
  %s4 = inlined_call_operand.hbm [shape: f32[4,2,8], index: 4, kind: output, shape index: {1}]
  %5 = xla_tuple %s3, %s4
  %s6 = sld [smem:[#allocation0]]
  $region57: #{tpu_custom_call.1} parent=0
    _
  %s8 = ssub.s32 1, %s6
  %s9 = scalar_select 0, %s8, %s6
  $region1: #{tpu_custom_call.1} parent=0
    #allocation2 [shape = 'u8[110592]{0}', space=vmem, size = 0x1b000, scoped, tag = 'input window, operand 1, single buffered']
    #allocation3 [shape = 's32[2]{0}', space=sflag, size = 0x8, scoped, tag = 'scoped memory for tpu_custom_call.1']
    #allocation4 [shape = 's32[2]{0}', space=sflag, size = 0x8, scoped, tag = 'scoped memory for tpu_custom_call.1']
    #allocation5 [shape = 'u8[8192]{0}', space=vmem, size = 0x2000, scoped, tag = 'output window, operand 0']
    #allocation6 [shape = 'u8[2048]{0}', space=vmem, size = 0x800, scoped, tag = 'output window, operand 1']
    #allocation7 [shape = 's32[2]{0}', space=sflag, size = 0x8, scoped, tag = 'scoped memory for tpu_custom_call.1']
    %10 = vsyncpa [#allocation3], 0
    %11 = vsyncpa [#allocation4], 0
    %s12 = scalar_lea.sflag [#allocation4], 1
    %13 = vsyncpa %s12, 0
    %14 = vsyncpa [#allocation7], 0
    %s15 = scalar_lea.sflag [#allocation7], 1
    %16 = vsyncpa %s15, 0
    loop: start=0, step=1, limit=6
    $region2: #{tpu_custom_call.1} parent=1 // loop_pre_header
      _
    $region3: #{tpu_custom_call.1} parent=1 // loop_header
      %s18 = sphi 0, %s22
      %p19 = scmp.ge.s32.totalorder %s18, 6
      %s28 = sphi 0, %s30
      %s31 = sphi 0, %s28
      %s32 = sphi 0, %s31
      %s48 = sphi 0, %s32
      %s52 = sphi 0, %s52
      %s54 = sphi 0, %s52
      %s55 = sphi 0, %s54
      %s69 = sphi 0, %s55
      %s73 = sphi 0, %s73
      %s75 = sphi 0, %s73
      %s76 = sphi 0, %s75
      %s90 = sphi 0, %s76
      %s96 = sphi 0, %s98
      %s99 = sphi 0, %s96
      %s100 = sphi 0, %s99
      %s116 = sphi 0, %s100
      %s122 = sphi 0, %s124
      %s125 = sphi 0, %s122
      %s126 = sphi 0, %s125
      %s142 = sphi 0, %s126
    $region4: #{tpu_custom_call.1} parent=1 // loop_header_branch
      %21 = sbr.rel (%p19) target = $region8
    $region5: #{tpu_custom_call.1} parent=1 // loop_body
      %s23 = ssub.s32 %s18, 1
      %s24 = ssub.s32 %s18, 2
      %s25 = sadd.s32 %s18, 1
      %s26 = ssub.s32 %s18, %s25
      %p27 = scmp.eq.s32.totalorder %s26, 0
      %s29 = sadd.s32 %s28, 1
      %s30 = scalar_select %p27, %s28, %s29
      %p33 = pneg %p27
      %p34 = scmp.eq.s32.totalorder %s18, 3
      %p35 = por %p33, %p34
      %p36 = scmp.ne.s32.totalorder %s28, %s31
      %p37 = scmp.eq.s32.totalorder %s18, 0
      %p38 = por %p36, %p37
      %p39 = scmp.ne.s32.totalorder %s28, %s31
      %p40 = scmp.eq.s32.totalorder %s23, 3
      %p41 = por %p39, %p40
      %p42 = scmp.ne.s32.totalorder %s31, %s32
      %p43 = scmp.eq.s32.totalorder %s23, 0
      %p44 = por %p42, %p43
      %p45 = scmp.ne.s32.totalorder %s31, %s32
      %p46 = scmp.eq.s32.totalorder %s24, 3
      %p47 = por %p45, %p46
      %p49 = scmp.ne.s32.totalorder %s32, %s48
      %p50 = scmp.eq.s32.totalorder %s24, 0
      %p51 = por %p49, %p50
      %s53 = sadd.s32 %s52, 1
      %p56 = scmp.eq.s32.totalorder %s18, 3
      %p57 = scmp.ne.s32.totalorder %s52, %s54
      %p58 = scmp.eq.s32.totalorder %s18, 0
      %p59 = por %p57, %p58
      %p60 = scmp.ne.s32.totalorder %s52, %s54
      %p61 = scmp.eq.s32.totalorder %s23, 3
      %p62 = por %p60, %p61
      %p63 = scmp.ne.s32.totalorder %s54, %s55
      %p64 = scmp.eq.s32.totalorder %s23, 0
      %p65 = por %p63, %p64
      %p66 = scmp.ne.s32.totalorder %s54, %s55
      %p67 = scmp.eq.s32.totalorder %s24, 3
      %p68 = por %p66, %p67
      %p70 = scmp.ne.s32.totalorder %s55, %s69
      %p71 = scmp.eq.s32.totalorder %s24, 0
      %p72 = por %p70, %p71
      %s74 = sadd.s32 %s73, 1
      %p77 = scmp.eq.s32.totalorder %s18, 3
      %p78 = scmp.ne.s32.totalorder %s73, %s75
      %p79 = scmp.eq.s32.totalorder %s18, 0
      %p80 = por %p78, %p79
      %p81 = scmp.ne.s32.totalorder %s73, %s75
      %p82 = scmp.eq.s32.totalorder %s23, 3
      %p83 = por %p81, %p82
      %p84 = scmp.ne.s32.totalorder %s75, %s76
      %p85 = scmp.eq.s32.totalorder %s23, 0
      %p86 = por %p84, %p85
      %p87 = scmp.ne.s32.totalorder %s75, %s76
      %p88 = scmp.eq.s32.totalorder %s24, 3
      %p89 = por %p87, %p88
      %p91 = scmp.ne.s32.totalorder %s76, %s90
      %p92 = scmp.eq.s32.totalorder %s24, 0
      %p93 = por %p91, %p92
      %s94 = ssub.s32 %s18, %s25
      %p95 = scmp.eq.s32.totalorder %s94, 0
      %s97 = sadd.s32 %s96, 1
      %s98 = scalar_select %p95, %s96, %s97
      %p101 = pneg %p95
      %p102 = scmp.eq.s32.totalorder %s18, 3
      %p103 = por %p101, %p102
      %p104 = scmp.ne.s32.totalorder %s96, %s99
      %p105 = scmp.eq.s32.totalorder %s18, 0
      %p106 = por %p104, %p105
      %p107 = scmp.ne.s32.totalorder %s96, %s99
      %p108 = scmp.eq.s32.totalorder %s23, 3
      %p109 = por %p107, %p108
      %p110 = scmp.ne.s32.totalorder %s99, %s100
      %p111 = scmp.eq.s32.totalorder %s23, 0
      %p112 = por %p110, %p111
      %p113 = scmp.ne.s32.totalorder %s99, %s100
      %p114 = scmp.eq.s32.totalorder %s24, 3
      %p115 = por %p113, %p114
      %p117 = scmp.ne.s32.totalorder %s100, %s116
      %p118 = scmp.eq.s32.totalorder %s24, 0
      %p119 = por %p117, %p118
      %s120 = ssub.s32 %s18, %s25
      %p121 = scmp.eq.s32.totalorder %s120, 0
      %s123 = sadd.s32 %s122, 1
      %s124 = scalar_select %p121, %s122, %s123
      %p127 = pneg %p121
      %p128 = scmp.eq.s32.totalorder %s18, 3
      %p129 = por %p127, %p128
      %p130 = scmp.ne.s32.totalorder %s122, %s125
      %p131 = scmp.eq.s32.totalorder %s18, 0
      %p132 = por %p130, %p131
      %p133 = scmp.ne.s32.totalorder %s122, %s125
      %p134 = scmp.eq.s32.totalorder %s23, 3
      %p135 = por %p133, %p134
      %p136 = scmp.ne.s32.totalorder %s125, %s126
      %p137 = scmp.eq.s32.totalorder %s23, 0
      %p138 = por %p136, %p137
      %p139 = scmp.ne.s32.totalorder %s125, %s126
      %p140 = scmp.eq.s32.totalorder %s24, 3
      %p141 = por %p139, %p140
      %p143 = scmp.ne.s32.totalorder %s126, %s142
      %p144 = scmp.eq.s32.totalorder %s24, 0
      %p145 = por %p143, %p144
      %p146 = scmp.le.s32.totalorder 1, %s18
      %p147 = scmp.lt.s32.totalorder %s18, 5
      %p148 = pnand %p146, %p147
      %p149 = pneg %p148
      // Predicated region
      $region9: #{tpu_custom_call.1} parent=5 // pred_check
        _
      $region10: #{tpu_custom_call.1} parent=5 // pred_check_branch
        %151 = sbr.rel (%p148) target = $region12
      $region11: #{tpu_custom_call.1} parent=5 // pred_region
        %s152 = ssub.s32 %s18, 1
        // Predicated region
        $region13: #{tpu_custom_call.1} parent=11 // pred_check
          %p153 = pneg %p65
        $region14: #{tpu_custom_call.1} parent=11 // pred_check_branch
          %155 = sbr.rel (%p153) target = $region16
        $region15: #{tpu_custom_call.1} parent=11 // pred_region
          %s157 = ssub.s32 3456, 3456
          %158 = vsyncadd [#allocation3], %s157
          %s159 = sshll.u32 [#allocation2], 4
          %s160 = int_to_ptr.vmem [resolvable:$true] %s159
          %165 = dma.hbm_to_vmem [thread:$0]  %s1, 3456, %s160, [#allocation3], 128, 128, 8
        $region16: #{tpu_custom_call.1} parent=11 // pred_fallthru
          _
        // Predicated region
        $region17: #{tpu_custom_call.1} parent=11 // pred_check
          %p166 = pneg %p86
        $region18: #{tpu_custom_call.1} parent=11 // pred_check_branch
          %168 = sbr.rel (%p166) target = $region20
        $region19: #{tpu_custom_call.1} parent=11 // pred_region
          _
        $region20: #{tpu_custom_call.1} parent=11 // pred_fallthru
          _
      $region12: #{tpu_custom_call.1} parent=5 // pred_fallthru
        _
      %p169 = scmp.lt.s32.totalorder %s18, 4
      // Predicated region
      $region21: #{tpu_custom_call.1} parent=5 // pred_check
        %p170 = pneg %p169
      $region22: #{tpu_custom_call.1} parent=5 // pred_check_branch
        %172 = sbr.rel (%p170) target = $region24
      $region23: #{tpu_custom_call.1} parent=5 // pred_region
        // Predicated region
        $region25: #{tpu_custom_call.1} parent=23 // pred_check
          %p173 = pneg %p38
        $region26: #{tpu_custom_call.1} parent=23 // pred_check_branch
          %175 = sbr.rel (%p173) target = $region28
        $region27: #{tpu_custom_call.1} parent=23 // pred_region
          %p176 = scmp.lt.s32.totalorder %s18, 3
          %s177 = scalar_select %p176, %s18, 3
          %s178 = smul.addr %s177, 2
          %s179 = smul.addr %s178, 8
          %s180 = scalar_lea.vmem %s0, %s179
        $region28: #{tpu_custom_call.1} parent=23 // pred_fallthru
          _
      $region24: #{tpu_custom_call.1} parent=5 // pred_fallthru
        _
      %p181 = scmp.le.s32.totalorder 1, %s18
      %p182 = scmp.lt.s32.totalorder %s18, 5
      %p183 = pnand %p181, %p182
      %p184 = pneg %p183
      // Predicated region
      $region29: #{tpu_custom_call.1} parent=5 // pred_check
        _
      $region30: #{tpu_custom_call.1} parent=5 // pred_check_branch
        %186 = sbr.rel (%p183) target = $region32
      $region31: #{tpu_custom_call.1} parent=5 // pred_region
        %s187 = ssub.s32 %s18, 1
        // Predicated region
        $region33: #{tpu_custom_call.1} parent=31 // pred_check
          %p188 = pneg %p65
        $region34: #{tpu_custom_call.1} parent=31 // pred_check_branch
          %190 = sbr.rel (%p188) target = $region36
        $region35: #{tpu_custom_call.1} parent=31 // pred_region
          %191 = dma.done [#allocation3], 3456
        $region36: #{tpu_custom_call.1} parent=31 // pred_fallthru
          _
        %p192 = scmp.lt.s32.totalorder %s23, 3
        %s193 = scalar_select %p192, %s23, 3
        %s194 = smul.addr %s193, 2
        %s195 = smul.addr %s194, 8
        %s196 = scalar_lea.vmem %s0, %s195
        %p197 = pneg %p44
        %p198 = pneg %p41
        %p199 = pneg %p65
        %p200 = pneg %p62
        %p201 = pneg %p86
        %p202 = pneg %p83
        %p203 = pneg %p112
        %p204 = pneg %p109
        %s205 = sand.u32 %s99, 1
        %s206 = scalar_lea.sflag [#allocation4], %s205
        %s207 = sand.u32 %s99, 1
        %s208 = smul.addr %s207, 8
        %s209 = scalar_lea.vmem [#allocation5], %s208
        %p210 = pneg %p138
        %p211 = pneg %p135
        %s212 = sand.u32 %s125, 1
        %s213 = scalar_lea.sflag [#allocation7], %s212
        %s214 = sand.u32 %s125, 1
        %s215 = smul.addr %s214, 2
        %s216 = scalar_lea.vmem [#allocation6], %s215
        %p217 = scmp.lt.s32.totalorder %s23, 3
        %s218 = scalar_select %p217, %s23, 3
        %s219 = smul.addr %s218, 2
        %s220 = smul.addr %s219, 8
        %s221 = scalar_lea.vmem %s0, %s220
        %v222 = vld [vmem:[%s221] sm:$0xff]
        %v223 = vld [vmem:[%s221 + $0x8] sm:$0xff]
        %v224 = vld [vmem:[#allocation2] sm:$0xff]
        %v225 = vld [vmem:[#allocation2 + $0x8] sm:$0xff]
        %v226 = vld [vmem:[#allocation2 + $0x10] sm:$0xff]
        %v227 = vld [vmem:[#allocation2 + $0x18] sm:$0xff]
        %v228 = vld [vmem:[#allocation2 + $0x20] sm:$0xff]
        %v229 = vld [vmem:[#allocation2 + $0x28] sm:$0xff]
        %v230 = vld [vmem:[#allocation2 + $0x30] sm:$0xff]
        %v231 = vld [vmem:[#allocation2 + $0x38] sm:$0xff]
        %v232 = vld [vmem:[#allocation2 + $0x40] sm:$0xff]
        %v233 = vld [vmem:[#allocation2 + $0x48] sm:$0xff]
        %v234 = vld [vmem:[#allocation2 + $0x50] sm:$0xff]
        %v235 = vld [vmem:[#allocation2 + $0x58] sm:$0xff]
        %v236 = vld [vmem:[#allocation2 + $0x60] sm:$0xff]
        %v237 = vld [vmem:[#allocation2 + $0x68] sm:$0xff]
        %v238 = vld [vmem:[#allocation2 + $0x70] sm:$0xff]
        %v239 = vld [vmem:[#allocation2 + $0x78] sm:$0xff]
        %v240 = vld [vmem:[#allocation2 + $0x80] sm:$0xff]
        %v241 = vld [vmem:[#allocation2 + $0x88] sm:$0xff]
        %v242 = vld [vmem:[#allocation2 + $0x90] sm:$0xff]
        %v243 = vld [vmem:[#allocation2 + $0x98] sm:$0xff]
        %v244 = vld [vmem:[#allocation2 + $0xa0] sm:$0xff]
        %v245 = vld [vmem:[#allocation2 + $0xa8] sm:$0xff]
        %v246 = vld [vmem:[#allocation2 + $0xb0] sm:$0xff]
        %v247 = vld [vmem:[#allocation2 + $0xb8] sm:$0xff]
        %v248 = vld [vmem:[#allocation2 + $0xc0] sm:$0xff]
        %v249 = vld [vmem:[#allocation2 + $0xc8] sm:$0xff]
        %v250 = vld [vmem:[#allocation2 + $0xd0] sm:$0xff]
        %vm251 = vcmask 719872
        %v253 = vsel %vm251, %v223, 0
        %255 = vmatprep.subr.mxu0 0.0
        %256 = vmatpush1.msra.mxu0 %v224
        %257 = vmatprep.subr.mxu0 0.0
        %258 = vmatpush1.msra.mxu0 %v225
        %259 = vmatprep.subr.mxu0 0.0
        %260 = vmatpush1.msra.mxu0 %v226
        %261 = vmatprep.subr.mxu0 0.0
        %262 = vmatpush1.msra.mxu0 %v227
        %263 = vmatprep.subr.mxu0 0.0
        %264 = vmatpush1.msra.mxu0 %v228
        %265 = vmatprep.subr.mxu0 0.0
        %266 = vmatpush1.msra.mxu0 %v229
        %267 = vmatprep.subr.mxu0 0.0
        %268 = vmatpush1.msra.mxu0 %v230
        %269 = vmatprep.subr.mxu0 0.0
        %270 = vmatpush1.msra.mxu0 %v231
        %271 = vmatprep.subr.mxu0 0.0
        %272 = vmatpush1.msra.mxu0 %v232
        %273 = vmatprep.subr.mxu0 0.0
        %274 = vmatpush1.msra.mxu0 %v233
        %275 = vmatprep.subr.mxu0 0.0
        %276 = vmatpush1.msra.mxu0 %v234
        %277 = vmatprep.subr.mxu0 0.0
        %278 = vmatpush1.msra.mxu0 %v235
        %279 = vmatprep.subr.mxu0 0.0
        %280 = vmatpush1.msra.mxu0 %v236
        %281 = vmatprep.subr.mxu0 0.0
        %282 = vmatpush1.msra.mxu0 %v237
        %283 = vmatprep.subr.mxu0 0.0
        %284 = vmatpush1.msra.mxu0 %v238
        %285 = vmatprep.subr.mxu0 0.0
        %286 = vmatpush1.msra.mxu0 %v239
        %287 = vmatprep.subr.mxu0 0.0
        %288 = vmatpush1.msra.mxu0 %v240
        %289 = vmatprep.subr.mxu0 0.0
        %290 = vmatpush1.msra.mxu0 %v241
        %291 = vmatprep.subr.mxu0 0.0
        %292 = vmatpush1.msra.mxu0 %v242
        %293 = vmatprep.subr.mxu0 0.0
        %294 = vmatpush1.msra.mxu0 %v243
        %295 = vmatprep.subr.mxu0 0.0
        %296 = vmatpush1.msra.mxu0 %v244
        %297 = vmatprep.subr.mxu0 0.0
        %298 = vmatpush1.msra.mxu0 %v245
        %299 = vmatprep.subr.mxu0 0.0
        %300 = vmatpush1.msra.mxu0 %v246
        %301 = vmatprep.subr.mxu0 0.0
        %302 = vmatpush1.msra.mxu0 %v247
        %303 = vmatprep.subr.mxu0 0.0
        %304 = vmatpush1.msra.mxu0 %v248
        %305 = vmatprep.subr.mxu0 0.0
        %306 = vmatpush1.msra.mxu0 %v249
        %307 = vmatprep.subr.mxu0 0.0
        %308 = vmatpush1.msra.mxu0 %v250
        %309 = vmatprep.subr.mxu0 0.0
        %310 = vmatpush1.msra.mxu0 0.0
        %311 = vmatprep.subr.mxu0 0.0
        %312 = vmatpush1.msra.mxu0 0.0
        %313 = vmatprep.subr.mxu0 0.0
        %314 = vmatpush1.msra.mxu0 0.0
        %315 = vmatprep.subr.mxu0 0.0
        %316 = vmatpush1.msra.mxu0 0.0
        %317 = vmatprep.subr.mxu0 0.0
        %318 = vmatpush1.msra.mxu0 0.0
        %319 = vmatprep.mubr.f32.mxu0 %v253
        %320 = vmatmul.mubr.f32.gmra.mrb[0].mxu0 %v222
        %v321 = vpop.f32.mrb[0].mxu0
        %v322 = vadd.f32 0.0, %v321
        %v323 = vpop.f32.mrb[0].mxu0
        %324 = vdwg.mxu0
        %325 = vst [vmem:[%s209] sm:$0xff] %v322
        %v326 = vrot.slane %v322, 4
        %v327 = vadd.f32 %v322, %v326
        %v328 = vrot.slane %v327, 2
        %v329 = vadd.f32 %v327, %v328
        %v330 = vrot.slane %v329, 1
        %v331 = vadd.f32 %v329, %v330
        %v332 = vmul.f32 %v322, %v322
        %v333 = vrot.slane %v332, 4
        %v334 = vadd.f32 %v332, %v333
        %v335 = vrot.slane %v334, 2
        %v336 = vadd.f32 %v334, %v335
        %v337 = vrot.slane %v336, 1
        %v338 = vadd.f32 %v336, %v337
        %vm339 = vcmask 1040384
        %v340 = vsel %vm339, %v331, %v338
        %v341 = vld [vmem:[%s2] sm:$0xff]
        %v342 = vld [vmem:[%s2 + $0x8] sm:$0xff]
        %v343 = vld [vmem:[%s2 + $0x10] sm:$0xff]
        %v344 = vld [vmem:[%s2 + $0x18] sm:$0xff]
        %v345 = vld [vmem:[%s2 + $0x20] sm:$0xff]
        %v346 = vld [vmem:[%s2 + $0x28] sm:$0xff]
        %v347 = vld [vmem:[%s2 + $0x30] sm:$0xff]
        %v348 = vld [vmem:[%s2 + $0x38] sm:$0xff]
        %v349 = vld [vmem:[%s2 + $0x40] sm:$0xff]
        %v350 = vld [vmem:[%s2 + $0x48] sm:$0xff]
        %v351 = vld [vmem:[%s2 + $0x50] sm:$0xff]
        %v352 = vld [vmem:[%s2 + $0x58] sm:$0xff]
        %v353 = vld [vmem:[%s2 + $0x60] sm:$0xff]
        %v354 = vld [vmem:[%s2 + $0x68] sm:$0xff]
        %v355 = vld [vmem:[%s2 + $0x70] sm:$0xff]
        %v356 = vld [vmem:[%s2 + $0x78] sm:$0xff]
        %357 = vmatprep.subr.mxu0 0.0
        %358 = vmatpush1.msra.mxu0 %v341
        %359 = vmatprep.subr.mxu0 0.0
        %360 = vmatpush1.msra.mxu0 %v342
        %361 = vmatprep.subr.mxu0 0.0
        %362 = vmatpush1.msra.mxu0 %v343
        %363 = vmatprep.subr.mxu0 0.0
        %364 = vmatpush1.msra.mxu0 %v344
        %365 = vmatprep.subr.mxu0 0.0
        %366 = vmatpush1.msra.mxu0 %v345
        %367 = vmatprep.subr.mxu0 0.0
        %368 = vmatpush1.msra.mxu0 %v346
        %369 = vmatprep.subr.mxu0 0.0
        %370 = vmatpush1.msra.mxu0 %v347
        %371 = vmatprep.subr.mxu0 0.0
        %372 = vmatpush1.msra.mxu0 %v348
        %373 = vmatprep.subr.mxu0 0.0
        %374 = vmatpush1.msra.mxu0 %v349
        %375 = vmatprep.subr.mxu0 0.0
        %376 = vmatpush1.msra.mxu0 %v350
        %377 = vmatprep.subr.mxu0 0.0
        %378 = vmatpush1.msra.mxu0 %v351
        %379 = vmatprep.subr.mxu0 0.0
        %380 = vmatpush1.msra.mxu0 %v352
        %381 = vmatprep.subr.mxu0 0.0
        %382 = vmatpush1.msra.mxu0 %v353
        %383 = vmatprep.subr.mxu0 0.0
        %384 = vmatpush1.msra.mxu0 %v354
        %385 = vmatprep.subr.mxu0 0.0
        %386 = vmatpush1.msra.mxu0 %v355
        %387 = vmatprep.subr.mxu0 0.0
        %388 = vmatpush1.msra.mxu0 %v356
        %389 = vmatprep.subr.mxu0 0.0
        %390 = vmatpush1.msra.mxu0 0.0
        %391 = vmatprep.subr.mxu0 0.0
        %392 = vmatpush1.msra.mxu0 0.0
        %393 = vmatprep.subr.mxu0 0.0
        %394 = vmatpush1.msra.mxu0 0.0
        %395 = vmatprep.subr.mxu0 0.0
        %396 = vmatpush1.msra.mxu0 0.0
        %397 = vmatprep.subr.mxu0 0.0
        %398 = vmatpush1.msra.mxu0 0.0
        %399 = vmatprep.subr.mxu0 0.0
        %400 = vmatpush1.msra.mxu0 0.0
        %401 = vmatprep.subr.mxu0 0.0
        %402 = vmatpush1.msra.mxu0 0.0
        %403 = vmatprep.subr.mxu0 0.0
        %404 = vmatpush1.msra.mxu0 0.0
        %405 = vmatprep.subr.mxu0 0.0
        %406 = vmatpush1.msra.mxu0 0.0
        %407 = vmatprep.subr.mxu0 0.0
        %408 = vmatpush1.msra.mxu0 0.0
        %409 = vmatprep.subr.mxu0 0.0
        %410 = vmatpush1.msra.mxu0 0.0
        %411 = vmatprep.subr.mxu0 0.0
        %412 = vmatpush1.msra.mxu0 0.0
        %413 = vmatprep.subr.mxu0 0.0
        %414 = vmatpush1.msra.mxu0 0.0
        %415 = vmatprep.subr.mxu0 0.0
        %416 = vmatpush1.msra.mxu0 0.0
        %417 = vmatprep.subr.mxu0 0.0
        %418 = vmatpush1.msra.mxu0 0.0
        %419 = vmatprep.subr.mxu0 0.0
        %420 = vmatpush1.msra.mxu0 0.0
        %421 = vmatprep.mubr.f32.mxu0 0.0
        %422 = vmatmul.mubr.f32.gmra.mrb[0].mxu0 %v340
        %v423 = vpop.f32.mrb[0].mxu0
        %v424 = vadd.f32 0.0, %v423
        %v425 = vpop.f32.mrb[0].mxu0
        %426 = vdwg.mxu0
        %vm427 = vcmask 58368
        %428 = vst.msk [vmem:[%s216] sm:$0x3] %vm427, %v424
        %s429 = sand.u32 %s99, 1
        %s430 = scalar_lea.sflag [#allocation4], %s429
        %s431 = sand.u32 %s99, 1
        %s432 = smul.addr %s431, 8
        %s433 = scalar_lea.vmem [#allocation5], %s432
        %s434 = sand.u32 %s125, 1
        %s435 = scalar_lea.sflag [#allocation7], %s434
        %s436 = sand.u32 %s125, 1
        %s437 = smul.addr %s436, 2
        %s438 = scalar_lea.vmem [#allocation6], %s437
        // Predicated region
        $region37: #{tpu_custom_call.1} parent=31 // pred_check
          %p439 = pneg %p109
        $region38: #{tpu_custom_call.1} parent=31 // pred_check_branch
          %441 = sbr.rel (%p439) target = $region40
        $region39: #{tpu_custom_call.1} parent=31 // pred_region
          %s443 = ssub.s32 128, 128
          %444 = vsyncadd %s430, %s443
          %s445 = smul.addr %s23, 128
          %s446 = scalar_lea.hbm %s3, %s445
          %s448 = sshll.u32 %s433, 4
          %s449 = int_to_ptr.vmem [resolvable:$true] %s448
          %451 = dma.vmem_to_hbm [thread:$0]  %s449, 128, %s446, %s430
        $region40: #{tpu_custom_call.1} parent=31 // pred_fallthru
          _
        // Predicated region
        $region41: #{tpu_custom_call.1} parent=31 // pred_check
          %p452 = pneg %p135
        $region42: #{tpu_custom_call.1} parent=31 // pred_check_branch
          %454 = sbr.rel (%p452) target = $region44
        $region43: #{tpu_custom_call.1} parent=31 // pred_region
          %s456 = ssub.s32 32, 32
          %457 = vsyncadd %s435, %s456
          %s458 = smul.addr %s23, 32
          %s459 = scalar_lea.hbm %s4, %s458
          %s461 = sshll.u32 %s438, 4
          %s462 = int_to_ptr.vmem [resolvable:$true] %s461
          %464 = dma.vmem_to_hbm [thread:$0]  %s462, 32, %s459, %s435
        $region44: #{tpu_custom_call.1} parent=31 // pred_fallthru
          _
      $region32: #{tpu_custom_call.1} parent=5 // pred_fallthru
        _
      %p465 = scmp.le.s32.totalorder 2, %s18
      // Predicated region
      $region45: #{tpu_custom_call.1} parent=5 // pred_check
        %p466 = pneg %p465
      $region46: #{tpu_custom_call.1} parent=5 // pred_check_branch
        %468 = sbr.rel (%p466) target = $region48
      $region47: #{tpu_custom_call.1} parent=5 // pred_region
        %s469 = ssub.s32 %s18, 2
        // Predicated region
        $region49: #{tpu_custom_call.1} parent=47 // pred_check
          %p470 = pneg %p115
        $region50: #{tpu_custom_call.1} parent=47 // pred_check_branch
          %472 = sbr.rel (%p470) target = $region52
        $region51: #{tpu_custom_call.1} parent=47 // pred_region
          %s473 = sand.u32 %s100, 1
          %s474 = scalar_lea.sflag [#allocation4], %s473
          %s475 = sand.u32 %s100, 1
          %s476 = smul.addr %s475, 8
          %s477 = scalar_lea.vmem [#allocation5], %s476
          %478 = dma.done %s474, 128
        $region52: #{tpu_custom_call.1} parent=47 // pred_fallthru
          _
        // Predicated region
        $region53: #{tpu_custom_call.1} parent=47 // pred_check
          %p479 = pneg %p141
        $region54: #{tpu_custom_call.1} parent=47 // pred_check_branch
          %481 = sbr.rel (%p479) target = $region56
        $region55: #{tpu_custom_call.1} parent=47 // pred_region
          %s482 = sand.u32 %s126, 1
          %s483 = scalar_lea.sflag [#allocation7], %s482
          %s484 = sand.u32 %s126, 1
          %s485 = smul.addr %s484, 2
          %s486 = scalar_lea.vmem [#allocation6], %s485
          %487 = dma.done %s483, 32
        $region56: #{tpu_custom_call.1} parent=47 // pred_fallthru
          _
      $region48: #{tpu_custom_call.1} parent=5 // pred_fallthru
        _
    $region6: #{tpu_custom_call.1} parent=1 // loop_footer
      %s22 = sadd.s32 1, %s18
    $region7: #{tpu_custom_call.1} parent=1 // loop_footer_branch
      %17 = sbr.rel target = $region3
    $region8: #{tpu_custom_call.1} parent=1 // loop_exit
      _
    %488 = vsyncpa [#allocation3], 1
    %s489 = scalar_lea.sflag [#allocation3], 1
    %490 = vsyncpa %s489, 1
    %491 = vsyncpa [#allocation4], 1
    %s492 = scalar_lea.sflag [#allocation4], 1
    %493 = vsyncpa %s492, 1
    %494 = vsyncpa [#allocation7], 1
    %s495 = scalar_lea.sflag [#allocation7], 1
    %496 = vsyncpa %s495, 1

</llo_original>
